<compile_context>
chip_gen: v5e
topology: v5e:2x2
jax: 0.10.0
libtpu: 0.0.40
codegen_flags: <defaults>
</compile_context>

<pallas_src>
import jax
import jax.numpy as jnp
from jax.experimental import pallas as pl
from jax.experimental.pallas import tpu as pltpu


def _device_vmem_budget():
    """Return (block_budget_bytes, vmem_limit_bytes_or_None) per TPU generation."""
    kind = ""
    try:
        kind = jax.devices()[0].device_kind.lower()
    except Exception:
        pass
    if "v5 lite" in kind or "v5e" in kind or "v5lite" in kind:
        return 8 << 20, None             # stay under v5e's 16 MiB scoped default
    if "v6" in kind:
        return 24 << 20, 64 << 20        # v6e: 128 MiB physical VMEM
    if "7" in kind:
        return 16 << 20, 32 << 20        # v7x: 64 MiB physical / 32 MiB scoped
    return 8 << 20, None                 # unknown generation: be conservative


def conv2d_pallas(x, w, b, *, batch_block=None):
    """Valid (padding=0, stride=1) 2-D convolution, NCHW / OIHW, like nn.Conv2d.

    x: (N, Cin, H, W); w: (Cout, Cin, KH, KW); b: (Cout,)
    returns (N, Cout, OH, OW) with OH = H-KH+1, OW = W-KW+1.
    """
    N, Cin, H, W = x.shape
    Cout, _, KH, KW = w.shape
    assert KH <= H and KW <= W
    OH, OW = H - KH + 1, W - KW + 1
    HW = H * W
    T = Cin * KH * KW

    # Roll-wrap safety guard (only valid for stride=1 / padding=0): every lane that a
    # tap roll wraps around (flat position p >= HW - off) must land in a row/column
    # that the final [:OH, :OW] crop discards.
    max_off = (KH - 1) * W + (KW - 1)
    assert HW - max_off >= (OH - 1) * W + OW, "roll wrap would touch valid outputs"

    blk_budget, vmem_limit = _device_vmem_budget()
    bytes_per_image = (Cin + Cout) * HW * max(x.dtype.itemsize, 4)
    max_bb_vmem = max(1, blk_budget // (2 * bytes_per_image))   # double-buffered blocks

    MAX_UNROLL = 8   # kernel Python-unrolls over the images of a block; keep it bounded
    if batch_block is None:
        batch_block = MAX_UNROLL
    bb = max(1, min(batch_block, N, MAX_UNROLL, max_bb_vmem))
    if bb >= N:
        bb = N                    # one block: grid of 1; no per-TC split of tiny batches
    elif bb % 8:
        # When the batch is split over the grid, the trailing (bb, HW) dims of the x
        # block must be 8-aligned; otherwise fall back to a single full block.
        bb = 8 if max_bb_vmem >= 8 else N
    n_pad = -(-N // bb) * bb      # pad ragged batches instead of degrading to bb=1
    grid_n = n_pad // bb

    # ---- wrapper-side layout: channel-major, lane-dense H*W rows -------------------
    x_cm = jnp.transpose(x.reshape(N, Cin, HW), (1, 0, 2))       # (Cin, N, HW)
    if n_pad != N:
        x_cm = jnp.pad(x_cm, ((0, 0), (0, n_pad - N), (0, 0)))
    w_cm = w.reshape(Cout, T).astype(jnp.float32)                # tap columns, Cout on sublanes
    b_cm = b.reshape(Cout, 1).astype(jnp.float32)

    def kernel(x_ref, w_ref, b_ref, o_ref):
        # x_ref: (Cin, bb, HW) channel-major; x_ref[ci, b] is a contiguous lane-dense row.
        # w_ref: (Cout, T)     one resident vreg of tap columns (Cout on sublanes).
        # b_ref: (Cout, 1)
        # o_ref: (bb, Cout, HW): one contiguous (Cout, HW) slab store per image.
        w_all = w_ref[...].astype(jnp.float32)
        bias_tile = jnp.broadcast_to(b_ref[...].astype(jnp.float32), (Cout, HW))  # hoisted
        for img in range(bb):                               # Python-unrolled, bb <= 8
            acc = bias_tile                                 # (Cout, HW) f32, Cout on sublanes
            for ci in range(Cin):
                row = x_ref[ci, img:img + 1, :].astype(jnp.float32)      # (1, HW) contiguous
                xcb = jnp.broadcast_to(row, (Cout, HW))     # one sublane bcast per (img, ci)
                for kh in range(KH):
                    for kw in range(KW):
                        off = kh * W + kw
                        tap = (ci * KH + kh) * KW + kw
                        # Lane roll on the XLU (slack slot); wrapped lanes only reach
                        # output positions the wrapper crops away.
                        shifted = xcb if off == 0 else pltpu.roll(xcb, HW - off, 1)
                        # One FMA-ish vector op per vreg covering all Cout channels.
                        acc = acc + shifted * w_all[:, tap:tap + 1]
            o_ref[img] = acc.astype(o_ref.dtype)            # single slab store per image

    cp_kwargs = dict(dimension_semantics=("parallel",))
    if vmem_limit is not None:
        cp_kwargs["vmem_limit_bytes"] = vmem_limit

    out_flat = pl.pallas_call(
        kernel,
        out_shape=jax.ShapeDtypeStruct((n_pad, Cout, HW), x.dtype),
        grid_spec=pltpu.PrefetchScalarGridSpec(
            num_scalar_prefetch=0,
            grid=(grid_n,),
            in_specs=[
                pl.BlockSpec((Cin, bb, HW), lambda n: (0, n, 0)),
                pl.BlockSpec((Cout, T), lambda n: (0, 0)),
                pl.BlockSpec((Cout, 1), lambda n: (0, 0)),
            ],
            out_specs=pl.BlockSpec((bb, Cout, HW), lambda n: (n, 0, 0)),
        ),
        compiler_params=pltpu.CompilerParams(**cp_kwargs),
    )(x_cm, w_cm, b_cm)

    # Crop the lane-dense rows back to the valid convolution window. (No consumer in
    # this module to fuse into; a fused consumer would index the slab directly.)
    return out_flat[:N].reshape(N, Cout, H, W)[:, :, :OH, :OW]


def init_params(key):
    """Deterministic init matching Conv2d(3, 6, 3) shapes (PyTorch-style uniform)."""
    cin, cout, kh, kw = 3, 6, 3, 3
    k_w, k_b = jax.random.split(key)
    fan_in = cin * kh * kw
    bound = 1.0 / jnp.sqrt(jnp.float32(fan_in))
    w = jax.random.uniform(k_w, (cout, cin, kh, kw), jnp.float32, -bound, bound)
    b = jax.random.uniform(k_b, (cout,), jnp.float32, -bound, bound)
    return w, b


if __name__ == "__main__":
    key = jax.random.PRNGKey(0)
    k_x, k_p = jax.random.split(key)

    # Small shapes consistent with Conv2d(in_channels=3, ...): NCHW = (2, 3, 16, 16)
    x = jax.random.normal(k_x, (2, 3, 16, 16), jnp.float32)
    w, b = init_params(k_p)

    out = jax.block_until_ready(conv2d_pallas(x, w, b))
    assert out.shape == (2, 6, 14, 14), out.shape

    # Pure-JAX reference check (valid conv, NCHW / OIHW).
    ref = jax.lax.conv_general_dilated(
        x, w, window_strides=(1, 1), padding="VALID",
        dimension_numbers=("NCHW", "OIHW", "NCHW"),
    ) + b[None, :, None, None]
    assert jnp.allclose(out, ref, atol=1e-4, rtol=1e-4), float(jnp.max(jnp.abs(out - ref)))

    print("KERNEL_OK")
</pallas_src>

<mosaic_0001>
module attributes {stable_mosaic.version = 11 : i64} {
  func.func @kernel(%arg0: i32, %arg1: memref<3x2x256xf32, #tpu.memory_space<vmem>>, %arg2: memref<6x27xf32, #tpu.memory_space<vmem>>, %arg3: memref<6x1xf32, #tpu.memory_space<vmem>>, %arg4: memref<2x6x256xf32, #tpu.memory_space<vmem>>) attributes {dimension_semantics = [#tpu.dimension_semantics<parallel>], iteration_bounds = array<i64: 1>, scalar_prefetch = 0 : i64, scratch_operands = 0 : i64, tpu.core_type = #tpu.core_type<tc>, window_params = [{transform_indices = @transform_0, window_bounds = array<i64: 3, 2, 256>}, {pipeline_mode = #tpu.pipeline_mode<synchronous>, transform_indices = @transform_1, window_bounds = array<i64: 6, 27>}, {pipeline_mode = #tpu.pipeline_mode<synchronous>, transform_indices = @transform_2, window_bounds = array<i64: 6, 1>}, {transform_indices = @transform_3, window_bounds = array<i64: 2, 6, 256>}]} {
    %c0 = arith.constant 0 : index
    %c0_0 = arith.constant 0 : index
    %0 = vector.load %arg2[%c0, %c0_0] : memref<6x27xf32, #tpu.memory_space<vmem>>, vector<6x27xf32>
    %c0_1 = arith.constant 0 : index
    %c0_2 = arith.constant 0 : index
    %1 = vector.load %arg3[%c0_1, %c0_2] : memref<6x1xf32, #tpu.memory_space<vmem>>, vector<6x1xf32>
    %2 = vector.shape_cast %1 : vector<6x1xf32> to vector<6x1xf32>
    %3 = vector.broadcast %2 : vector<6x1xf32> to vector<6x256xf32>
    %c0_3 = arith.constant 0 : index
    %c0_4 = arith.constant 0 : index
    %c0_5 = arith.constant 0 : index
    %4 = vector.load %arg1[%c0_3, %c0_4, %c0_5] : memref<3x2x256xf32, #tpu.memory_space<vmem>>, vector<1x1x256xf32>
    %5 = vector.shape_cast %4 : vector<1x1x256xf32> to vector<1x256xf32>
    %6 = vector.shape_cast %5 : vector<1x256xf32> to vector<1x256xf32>
    %7 = vector.broadcast %6 : vector<1x256xf32> to vector<6x256xf32>
    %8 = vector.extract_strided_slice %0 {offsets = [0, 0], sizes = [6, 1], strides = [1, 1]} : vector<6x27xf32> to vector<6x1xf32>
    %9 = vector.broadcast %8 : vector<6x1xf32> to vector<6x256xf32>
    %10 = arith.mulf %7, %9 : vector<6x256xf32>
    %11 = arith.addf %3, %10 : vector<6x256xf32>
    %c255_i32 = arith.constant 255 : i32
    %12 = tpu.dynamic_rotate %7 by %c255_i32 dim 1 : vector<6x256xf32>, i32 -> vector<6x256xf32>
    %13 = vector.extract_strided_slice %0 {offsets = [0, 1], sizes = [6, 1], strides = [1, 1]} : vector<6x27xf32> to vector<6x1xf32>
    %14 = vector.broadcast %13 : vector<6x1xf32> to vector<6x256xf32>
    %15 = arith.mulf %12, %14 : vector<6x256xf32>
    %16 = arith.addf %11, %15 : vector<6x256xf32>
    %c254_i32 = arith.constant 254 : i32
    %17 = tpu.dynamic_rotate %7 by %c254_i32 dim 1 : vector<6x256xf32>, i32 -> vector<6x256xf32>
    %18 = vector.extract_strided_slice %0 {offsets = [0, 2], sizes = [6, 1], strides = [1, 1]} : vector<6x27xf32> to vector<6x1xf32>
    %19 = vector.broadcast %18 : vector<6x1xf32> to vector<6x256xf32>
    %20 = arith.mulf %17, %19 : vector<6x256xf32>
    %21 = arith.addf %16, %20 : vector<6x256xf32>
    %c240_i32 = arith.constant 240 : i32
    %22 = tpu.dynamic_rotate %7 by %c240_i32 dim 1 : vector<6x256xf32>, i32 -> vector<6x256xf32>
    %23 = vector.extract_strided_slice %0 {offsets = [0, 3], sizes = [6, 1], strides = [1, 1]} : vector<6x27xf32> to vector<6x1xf32>
    %24 = vector.broadcast %23 : vector<6x1xf32> to vector<6x256xf32>
    %25 = arith.mulf %22, %24 : vector<6x256xf32>
    %26 = arith.addf %21, %25 : vector<6x256xf32>
    %c239_i32 = arith.constant 239 : i32
    %27 = tpu.dynamic_rotate %7 by %c239_i32 dim 1 : vector<6x256xf32>, i32 -> vector<6x256xf32>
    %28 = vector.extract_strided_slice %0 {offsets = [0, 4], sizes = [6, 1], strides = [1, 1]} : vector<6x27xf32> to vector<6x1xf32>
    %29 = vector.broadcast %28 : vector<6x1xf32> to vector<6x256xf32>
    %30 = arith.mulf %27, %29 : vector<6x256xf32>
    %31 = arith.addf %26, %30 : vector<6x256xf32>
    %c238_i32 = arith.constant 238 : i32
    %32 = tpu.dynamic_rotate %7 by %c238_i32 dim 1 : vector<6x256xf32>, i32 -> vector<6x256xf32>
    %33 = vector.extract_strided_slice %0 {offsets = [0, 5], sizes = [6, 1], strides = [1, 1]} : vector<6x27xf32> to vector<6x1xf32>
    %34 = vector.broadcast %33 : vector<6x1xf32> to vector<6x256xf32>
    %35 = arith.mulf %32, %34 : vector<6x256xf32>
    %36 = arith.addf %31, %35 : vector<6x256xf32>
    %c224_i32 = arith.constant 224 : i32
    %37 = tpu.dynamic_rotate %7 by %c224_i32 dim 1 : vector<6x256xf32>, i32 -> vector<6x256xf32>
    %38 = vector.extract_strided_slice %0 {offsets = [0, 6], sizes = [6, 1], strides = [1, 1]} : vector<6x27xf32> to vector<6x1xf32>
    %39 = vector.broadcast %38 : vector<6x1xf32> to vector<6x256xf32>
    %40 = arith.mulf %37, %39 : vector<6x256xf32>
    %41 = arith.addf %36, %40 : vector<6x256xf32>
    %c223_i32 = arith.constant 223 : i32
    %42 = tpu.dynamic_rotate %7 by %c223_i32 dim 1 : vector<6x256xf32>, i32 -> vector<6x256xf32>
    %43 = vector.extract_strided_slice %0 {offsets = [0, 7], sizes = [6, 1], strides = [1, 1]} : vector<6x27xf32> to vector<6x1xf32>
    %44 = vector.broadcast %43 : vector<6x1xf32> to vector<6x256xf32>
    %45 = arith.mulf %42, %44 : vector<6x256xf32>
    %46 = arith.addf %41, %45 : vector<6x256xf32>
    %c222_i32 = arith.constant 222 : i32
    %47 = tpu.dynamic_rotate %7 by %c222_i32 dim 1 : vector<6x256xf32>, i32 -> vector<6x256xf32>
    %48 = vector.extract_strided_slice %0 {offsets = [0, 8], sizes = [6, 1], strides = [1, 1]} : vector<6x27xf32> to vector<6x1xf32>
    %49 = vector.broadcast %48 : vector<6x1xf32> to vector<6x256xf32>
    %50 = arith.mulf %47, %49 : vector<6x256xf32>
    %51 = arith.addf %46, %50 : vector<6x256xf32>
    %c1 = arith.constant 1 : index
    %c0_6 = arith.constant 0 : index
    %c0_7 = arith.constant 0 : index
    %52 = vector.load %arg1[%c1, %c0_6, %c0_7] : memref<3x2x256xf32, #tpu.memory_space<vmem>>, vector<1x1x256xf32>
    %53 = vector.shape_cast %52 : vector<1x1x256xf32> to vector<1x256xf32>
    %54 = vector.shape_cast %53 : vector<1x256xf32> to vector<1x256xf32>
    %55 = vector.broadcast %54 : vector<1x256xf32> to vector<6x256xf32>
    %56 = vector.extract_strided_slice %0 {offsets = [0, 9], sizes = [6, 1], strides = [1, 1]} : vector<6x27xf32> to vector<6x1xf32>
    %57 = vector.broadcast %56 : vector<6x1xf32> to vector<6x256xf32>
    %58 = arith.mulf %55, %57 : vector<6x256xf32>
    %59 = arith.addf %51, %58 : vector<6x256xf32>
    %c255_i32_8 = arith.constant 255 : i32
    %60 = tpu.dynamic_rotate %55 by %c255_i32_8 dim 1 : vector<6x256xf32>, i32 -> vector<6x256xf32>
    %61 = vector.extract_strided_slice %0 {offsets = [0, 10], sizes = [6, 1], strides = [1, 1]} : vector<6x27xf32> to vector<6x1xf32>
    %62 = vector.broadcast %61 : vector<6x1xf32> to vector<6x256xf32>
    %63 = arith.mulf %60, %62 : vector<6x256xf32>
    %64 = arith.addf %59, %63 : vector<6x256xf32>
    %c254_i32_9 = arith.constant 254 : i32
    %65 = tpu.dynamic_rotate %55 by %c254_i32_9 dim 1 : vector<6x256xf32>, i32 -> vector<6x256xf32>
    %66 = vector.extract_strided_slice %0 {offsets = [0, 11], sizes = [6, 1], strides = [1, 1]} : vector<6x27xf32> to vector<6x1xf32>
    %67 = vector.broadcast %66 : vector<6x1xf32> to vector<6x256xf32>
    %68 = arith.mulf %65, %67 : vector<6x256xf32>
    %69 = arith.addf %64, %68 : vector<6x256xf32>
    %c240_i32_10 = arith.constant 240 : i32
    %70 = tpu.dynamic_rotate %55 by %c240_i32_10 dim 1 : vector<6x256xf32>, i32 -> vector<6x256xf32>
    %71 = vector.extract_strided_slice %0 {offsets = [0, 12], sizes = [6, 1], strides = [1, 1]} : vector<6x27xf32> to vector<6x1xf32>
    %72 = vector.broadcast %71 : vector<6x1xf32> to vector<6x256xf32>
    %73 = arith.mulf %70, %72 : vector<6x256xf32>
    %74 = arith.addf %69, %73 : vector<6x256xf32>
    %c239_i32_11 = arith.constant 239 : i32
    %75 = tpu.dynamic_rotate %55 by %c239_i32_11 dim 1 : vector<6x256xf32>, i32 -> vector<6x256xf32>
    %76 = vector.extract_strided_slice %0 {offsets = [0, 13], sizes = [6, 1], strides = [1, 1]} : vector<6x27xf32> to vector<6x1xf32>
    %77 = vector.broadcast %76 : vector<6x1xf32> to vector<6x256xf32>
    %78 = arith.mulf %75, %77 : vector<6x256xf32>
    %79 = arith.addf %74, %78 : vector<6x256xf32>
    %c238_i32_12 = arith.constant 238 : i32
    %80 = tpu.dynamic_rotate %55 by %c238_i32_12 dim 1 : vector<6x256xf32>, i32 -> vector<6x256xf32>
    %81 = vector.extract_strided_slice %0 {offsets = [0, 14], sizes = [6, 1], strides = [1, 1]} : vector<6x27xf32> to vector<6x1xf32>
    %82 = vector.broadcast %81 : vector<6x1xf32> to vector<6x256xf32>
    %83 = arith.mulf %80, %82 : vector<6x256xf32>
    %84 = arith.addf %79, %83 : vector<6x256xf32>
    %c224_i32_13 = arith.constant 224 : i32
    %85 = tpu.dynamic_rotate %55 by %c224_i32_13 dim 1 : vector<6x256xf32>, i32 -> vector<6x256xf32>
    %86 = vector.extract_strided_slice %0 {offsets = [0, 15], sizes = [6, 1], strides = [1, 1]} : vector<6x27xf32> to vector<6x1xf32>
    %87 = vector.broadcast %86 : vector<6x1xf32> to vector<6x256xf32>
    %88 = arith.mulf %85, %87 : vector<6x256xf32>
    %89 = arith.addf %84, %88 : vector<6x256xf32>
    %c223_i32_14 = arith.constant 223 : i32
    %90 = tpu.dynamic_rotate %55 by %c223_i32_14 dim 1 : vector<6x256xf32>, i32 -> vector<6x256xf32>
    %91 = vector.extract_strided_slice %0 {offsets = [0, 16], sizes = [6, 1], strides = [1, 1]} : vector<6x27xf32> to vector<6x1xf32>
    %92 = vector.broadcast %91 : vector<6x1xf32> to vector<6x256xf32>
    %93 = arith.mulf %90, %92 : vector<6x256xf32>
    %94 = arith.addf %89, %93 : vector<6x256xf32>
    %c222_i32_15 = arith.constant 222 : i32
    %95 = tpu.dynamic_rotate %55 by %c222_i32_15 dim 1 : vector<6x256xf32>, i32 -> vector<6x256xf32>
    %96 = vector.extract_strided_slice %0 {offsets = [0, 17], sizes = [6, 1], strides = [1, 1]} : vector<6x27xf32> to vector<6x1xf32>
    %97 = vector.broadcast %96 : vector<6x1xf32> to vector<6x256xf32>
    %98 = arith.mulf %95, %97 : vector<6x256xf32>
    %99 = arith.addf %94, %98 : vector<6x256xf32>
    %c2 = arith.constant 2 : index
    %c0_16 = arith.constant 0 : index
    %c0_17 = arith.constant 0 : index
    %100 = vector.load %arg1[%c2, %c0_16, %c0_17] : memref<3x2x256xf32, #tpu.memory_space<vmem>>, vector<1x1x256xf32>
    %101 = vector.shape_cast %100 : vector<1x1x256xf32> to vector<1x256xf32>
    %102 = vector.shape_cast %101 : vector<1x256xf32> to vector<1x256xf32>
    %103 = vector.broadcast %102 : vector<1x256xf32> to vector<6x256xf32>
    %104 = vector.extract_strided_slice %0 {offsets = [0, 18], sizes = [6, 1], strides = [1, 1]} : vector<6x27xf32> to vector<6x1xf32>
    %105 = vector.broadcast %104 : vector<6x1xf32> to vector<6x256xf32>
    %106 = arith.mulf %103, %105 : vector<6x256xf32>
    %107 = arith.addf %99, %106 : vector<6x256xf32>
    %c255_i32_18 = arith.constant 255 : i32
    %108 = tpu.dynamic_rotate %103 by %c255_i32_18 dim 1 : vector<6x256xf32>, i32 -> vector<6x256xf32>
    %109 = vector.extract_strided_slice %0 {offsets = [0, 19], sizes = [6, 1], strides = [1, 1]} : vector<6x27xf32> to vector<6x1xf32>
    %110 = vector.broadcast %109 : vector<6x1xf32> to vector<6x256xf32>
    %111 = arith.mulf %108, %110 : vector<6x256xf32>
    %112 = arith.addf %107, %111 : vector<6x256xf32>
    %c254_i32_19 = arith.constant 254 : i32
    %113 = tpu.dynamic_rotate %103 by %c254_i32_19 dim 1 : vector<6x256xf32>, i32 -> vector<6x256xf32>
    %114 = vector.extract_strided_slice %0 {offsets = [0, 20], sizes = [6, 1], strides = [1, 1]} : vector<6x27xf32> to vector<6x1xf32>
    %115 = vector.broadcast %114 : vector<6x1xf32> to vector<6x256xf32>
    %116 = arith.mulf %113, %115 : vector<6x256xf32>
    %117 = arith.addf %112, %116 : vector<6x256xf32>
    %c240_i32_20 = arith.constant 240 : i32
    %118 = tpu.dynamic_rotate %103 by %c240_i32_20 dim 1 : vector<6x256xf32>, i32 -> vector<6x256xf32>
    %119 = vector.extract_strided_slice %0 {offsets = [0, 21], sizes = [6, 1], strides = [1, 1]} : vector<6x27xf32> to vector<6x1xf32>
    %120 = vector.broadcast %119 : vector<6x1xf32> to vector<6x256xf32>
    %121 = arith.mulf %118, %120 : vector<6x256xf32>
    %122 = arith.addf %117, %121 : vector<6x256xf32>
    %c239_i32_21 = arith.constant 239 : i32
    %123 = tpu.dynamic_rotate %103 by %c239_i32_21 dim 1 : vector<6x256xf32>, i32 -> vector<6x256xf32>
    %124 = vector.extract_strided_slice %0 {offsets = [0, 22], sizes = [6, 1], strides = [1, 1]} : vector<6x27xf32> to vector<6x1xf32>
    %125 = vector.broadcast %124 : vector<6x1xf32> to vector<6x256xf32>
    %126 = arith.mulf %123, %125 : vector<6x256xf32>
    %127 = arith.addf %122, %126 : vector<6x256xf32>
    %c238_i32_22 = arith.constant 238 : i32
    %128 = tpu.dynamic_rotate %103 by %c238_i32_22 dim 1 : vector<6x256xf32>, i32 -> vector<6x256xf32>
    %129 = vector.extract_strided_slice %0 {offsets = [0, 23], sizes = [6, 1], strides = [1, 1]} : vector<6x27xf32> to vector<6x1xf32>
    %130 = vector.broadcast %129 : vector<6x1xf32> to vector<6x256xf32>
    %131 = arith.mulf %128, %130 : vector<6x256xf32>
    %132 = arith.addf %127, %131 : vector<6x256xf32>
    %c224_i32_23 = arith.constant 224 : i32
    %133 = tpu.dynamic_rotate %103 by %c224_i32_23 dim 1 : vector<6x256xf32>, i32 -> vector<6x256xf32>
    %134 = vector.extract_strided_slice %0 {offsets = [0, 24], sizes = [6, 1], strides = [1, 1]} : vector<6x27xf32> to vector<6x1xf32>
    %135 = vector.broadcast %134 : vector<6x1xf32> to vector<6x256xf32>
    %136 = arith.mulf %133, %135 : vector<6x256xf32>
    %137 = arith.addf %132, %136 : vector<6x256xf32>
    %c223_i32_24 = arith.constant 223 : i32
    %138 = tpu.dynamic_rotate %103 by %c223_i32_24 dim 1 : vector<6x256xf32>, i32 -> vector<6x256xf32>
    %139 = vector.extract_strided_slice %0 {offsets = [0, 25], sizes = [6, 1], strides = [1, 1]} : vector<6x27xf32> to vector<6x1xf32>
    %140 = vector.broadcast %139 : vector<6x1xf32> to vector<6x256xf32>
    %141 = arith.mulf %138, %140 : vector<6x256xf32>
    %142 = arith.addf %137, %141 : vector<6x256xf32>
    %c222_i32_25 = arith.constant 222 : i32
    %143 = tpu.dynamic_rotate %103 by %c222_i32_25 dim 1 : vector<6x256xf32>, i32 -> vector<6x256xf32>
    %144 = vector.extract_strided_slice %0 {offsets = [0, 26], sizes = [6, 1], strides = [1, 1]} : vector<6x27xf32> to vector<6x1xf32>
    %145 = vector.broadcast %144 : vector<6x1xf32> to vector<6x256xf32>
    %146 = arith.mulf %143, %145 : vector<6x256xf32>
    %147 = arith.addf %142, %146 : vector<6x256xf32>
    %c0_26 = arith.constant 0 : index
    %c0_27 = arith.constant 0 : index
    %c0_28 = arith.constant 0 : index
    %148 = vector.load %arg4[%c0_26, %c0_27, %c0_28] : memref<2x6x256xf32, #tpu.memory_space<vmem>>, vector<1x6x256xf32>
    %149 = vector.shape_cast %148 : vector<1x6x256xf32> to vector<6x256xf32>
    %150 = vector.shape_cast %147 : vector<6x256xf32> to vector<1x6x256xf32>
    tpu.vector_store %arg4[%c0_26, %c0_27, %c0_28], %150 {strides = array<i32>} : memref<2x6x256xf32, #tpu.memory_space<vmem>>, vector<1x6x256xf32>,
    %c0_29 = arith.constant 0 : index
    %c1_30 = arith.constant 1 : index
    %c0_31 = arith.constant 0 : index
    %151 = vector.load %arg1[%c0_29, %c1_30, %c0_31] : memref<3x2x256xf32, #tpu.memory_space<vmem>>, vector<1x1x256xf32>
    %152 = vector.shape_cast %151 : vector<1x1x256xf32> to vector<1x256xf32>
    %153 = vector.shape_cast %152 : vector<1x256xf32> to vector<1x256xf32>
    %154 = vector.broadcast %153 : vector<1x256xf32> to vector<6x256xf32>
    %155 = vector.extract_strided_slice %0 {offsets = [0, 0], sizes = [6, 1], strides = [1, 1]} : vector<6x27xf32> to vector<6x1xf32>
    %156 = vector.broadcast %155 : vector<6x1xf32> to vector<6x256xf32>
    %157 = arith.mulf %154, %156 : vector<6x256xf32>
    %158 = arith.addf %3, %157 : vector<6x256xf32>
    %c255_i32_32 = arith.constant 255 : i32
    %159 = tpu.dynamic_rotate %154 by %c255_i32_32 dim 1 : vector<6x256xf32>, i32 -> vector<6x256xf32>
    %160 = vector.extract_strided_slice %0 {offsets = [0, 1], sizes = [6, 1], strides = [1, 1]} : vector<6x27xf32> to vector<6x1xf32>
    %161 = vector.broadcast %160 : vector<6x1xf32> to vector<6x256xf32>
    %162 = arith.mulf %159, %161 : vector<6x256xf32>
    %163 = arith.addf %158, %162 : vector<6x256xf32>
    %c254_i32_33 = arith.constant 254 : i32
    %164 = tpu.dynamic_rotate %154 by %c254_i32_33 dim 1 : vector<6x256xf32>, i32 -> vector<6x256xf32>
    %165 = vector.extract_strided_slice %0 {offsets = [0, 2], sizes = [6, 1], strides = [1, 1]} : vector<6x27xf32> to vector<6x1xf32>
    %166 = vector.broadcast %165 : vector<6x1xf32> to vector<6x256xf32>
    %167 = arith.mulf %164, %166 : vector<6x256xf32>
    %168 = arith.addf %163, %167 : vector<6x256xf32>
    %c240_i32_34 = arith.constant 240 : i32
    %169 = tpu.dynamic_rotate %154 by %c240_i32_34 dim 1 : vector<6x256xf32>, i32 -> vector<6x256xf32>
    %170 = vector.extract_strided_slice %0 {offsets = [0, 3], sizes = [6, 1], strides = [1, 1]} : vector<6x27xf32> to vector<6x1xf32>
    %171 = vector.broadcast %170 : vector<6x1xf32> to vector<6x256xf32>
    %172 = arith.mulf %169, %171 : vector<6x256xf32>
    %173 = arith.addf %168, %172 : vector<6x256xf32>
    %c239_i32_35 = arith.constant 239 : i32
    %174 = tpu.dynamic_rotate %154 by %c239_i32_35 dim 1 : vector<6x256xf32>, i32 -> vector<6x256xf32>
    %175 = vector.extract_strided_slice %0 {offsets = [0, 4], sizes = [6, 1], strides = [1, 1]} : vector<6x27xf32> to vector<6x1xf32>
    %176 = vector.broadcast %175 : vector<6x1xf32> to vector<6x256xf32>
    %177 = arith.mulf %174, %176 : vector<6x256xf32>
    %178 = arith.addf %173, %177 : vector<6x256xf32>
    %c238_i32_36 = arith.constant 238 : i32
    %179 = tpu.dynamic_rotate %154 by %c238_i32_36 dim 1 : vector<6x256xf32>, i32 -> vector<6x256xf32>
    %180 = vector.extract_strided_slice %0 {offsets = [0, 5], sizes = [6, 1], strides = [1, 1]} : vector<6x27xf32> to vector<6x1xf32>
    %181 = vector.broadcast %180 : vector<6x1xf32> to vector<6x256xf32>
    %182 = arith.mulf %179, %181 : vector<6x256xf32>
    %183 = arith.addf %178, %182 : vector<6x256xf32>
    %c224_i32_37 = arith.constant 224 : i32
    %184 = tpu.dynamic_rotate %154 by %c224_i32_37 dim 1 : vector<6x256xf32>, i32 -> vector<6x256xf32>
    %185 = vector.extract_strided_slice %0 {offsets = [0, 6], sizes = [6, 1], strides = [1, 1]} : vector<6x27xf32> to vector<6x1xf32>
    %186 = vector.broadcast %185 : vector<6x1xf32> to vector<6x256xf32>
    %187 = arith.mulf %184, %186 : vector<6x256xf32>
    %188 = arith.addf %183, %187 : vector<6x256xf32>
    %c223_i32_38 = arith.constant 223 : i32
    %189 = tpu.dynamic_rotate %154 by %c223_i32_38 dim 1 : vector<6x256xf32>, i32 -> vector<6x256xf32>
    %190 = vector.extract_strided_slice %0 {offsets = [0, 7], sizes = [6, 1], strides = [1, 1]} : vector<6x27xf32> to vector<6x1xf32>
    %191 = vector.broadcast %190 : vector<6x1xf32> to vector<6x256xf32>
    %192 = arith.mulf %189, %191 : vector<6x256xf32>
    %193 = arith.addf %188, %192 : vector<6x256xf32>
    %c222_i32_39 = arith.constant 222 : i32
    %194 = tpu.dynamic_rotate %154 by %c222_i32_39 dim 1 : vector<6x256xf32>, i32 -> vector<6x256xf32>
    %195 = vector.extract_strided_slice %0 {offsets = [0, 8], sizes = [6, 1], strides = [1, 1]} : vector<6x27xf32> to vector<6x1xf32>
    %196 = vector.broadcast %195 : vector<6x1xf32> to vector<6x256xf32>
    %197 = arith.mulf %194, %196 : vector<6x256xf32>
    %198 = arith.addf %193, %197 : vector<6x256xf32>
    %c1_40 = arith.constant 1 : index
    %c1_41 = arith.constant 1 : index
    %c0_42 = arith.constant 0 : index
    %199 = vector.load %arg1[%c1_40, %c1_41, %c0_42] : memref<3x2x256xf32, #tpu.memory_space<vmem>>, vector<1x1x256xf32>
    %200 = vector.shape_cast %199 : vector<1x1x256xf32> to vector<1x256xf32>
    %201 = vector.shape_cast %200 : vector<1x256xf32> to vector<1x256xf32>
    %202 = vector.broadcast %201 : vector<1x256xf32> to vector<6x256xf32>
    %203 = vector.extract_strided_slice %0 {offsets = [0, 9], sizes = [6, 1], strides = [1, 1]} : vector<6x27xf32> to vector<6x1xf32>
    %204 = vector.broadcast %203 : vector<6x1xf32> to vector<6x256xf32>
    %205 = arith.mulf %202, %204 : vector<6x256xf32>
    %206 = arith.addf %198, %205 : vector<6x256xf32>
    %c255_i32_43 = arith.constant 255 : i32
    %207 = tpu.dynamic_rotate %202 by %c255_i32_43 dim 1 : vector<6x256xf32>, i32 -> vector<6x256xf32>
    %208 = vector.extract_strided_slice %0 {offsets = [0, 10], sizes = [6, 1], strides = [1, 1]} : vector<6x27xf32> to vector<6x1xf32>
    %209 = vector.broadcast %208 : vector<6x1xf32> to vector<6x256xf32>
    %210 = arith.mulf %207, %209 : vector<6x256xf32>
    %211 = arith.addf %206, %210 : vector<6x256xf32>
    %c254_i32_44 = arith.constant 254 : i32
    %212 = tpu.dynamic_rotate %202 by %c254_i32_44 dim 1 : vector<6x256xf32>, i32 -> vector<6x256xf32>
    %213 = vector.extract_strided_slice %0 {offsets = [0, 11], sizes = [6, 1], strides = [1, 1]} : vector<6x27xf32> to vector<6x1xf32>
    %214 = vector.broadcast %213 : vector<6x1xf32> to vector<6x256xf32>
    %215 = arith.mulf %212, %214 : vector<6x256xf32>
    %216 = arith.addf %211, %215 : vector<6x256xf32>
    %c240_i32_45 = arith.constant 240 : i32
    %217 = tpu.dynamic_rotate %202 by %c240_i32_45 dim 1 : vector<6x256xf32>, i32 -> vector<6x256xf32>
    %218 = vector.extract_strided_slice %0 {offsets = [0, 12], sizes = [6, 1], strides = [1, 1]} : vector<6x27xf32> to vector<6x1xf32>
    %219 = vector.broadcast %218 : vector<6x1xf32> to vector<6x256xf32>
    %220 = arith.mulf %217, %219 : vector<6x256xf32>
    %221 = arith.addf %216, %220 : vector<6x256xf32>
    %c239_i32_46 = arith.constant 239 : i32
    %222 = tpu.dynamic_rotate %202 by %c239_i32_46 dim 1 : vector<6x256xf32>, i32 -> vector<6x256xf32>
    %223 = vector.extract_strided_slice %0 {offsets = [0, 13], sizes = [6, 1], strides = [1, 1]} : vector<6x27xf32> to vector<6x1xf32>
    %224 = vector.broadcast %223 : vector<6x1xf32> to vector<6x256xf32>
    %225 = arith.mulf %222, %224 : vector<6x256xf32>
    %226 = arith.addf %221, %225 : vector<6x256xf32>
    %c238_i32_47 = arith.constant 238 : i32
    %227 = tpu.dynamic_rotate %202 by %c238_i32_47 dim 1 : vector<6x256xf32>, i32 -> vector<6x256xf32>
    %228 = vector.extract_strided_slice %0 {offsets = [0, 14], sizes = [6, 1], strides = [1, 1]} : vector<6x27xf32> to vector<6x1xf32>
    %229 = vector.broadcast %228 : vector<6x1xf32> to vector<6x256xf32>
    %230 = arith.mulf %227, %229 : vector<6x256xf32>
    %231 = arith.addf %226, %230 : vector<6x256xf32>
    %c224_i32_48 = arith.constant 224 : i32
    %232 = tpu.dynamic_rotate %202 by %c224_i32_48 dim 1 : vector<6x256xf32>, i32 -> vector<6x256xf32>
    %233 = vector.extract_strided_slice %0 {offsets = [0, 15], sizes = [6, 1], strides = [1, 1]} : vector<6x27xf32> to vector<6x1xf32>
    %234 = vector.broadcast %233 : vector<6x1xf32> to vector<6x256xf32>
    %235 = arith.mulf %232, %234 : vector<6x256xf32>
    %236 = arith.addf %231, %235 : vector<6x256xf32>
    %c223_i32_49 = arith.constant 223 : i32
    %237 = tpu.dynamic_rotate %202 by %c223_i32_49 dim 1 : vector<6x256xf32>, i32 -> vector<6x256xf32>
    %238 = vector.extract_strided_slice %0 {offsets = [0, 16], sizes = [6, 1], strides = [1, 1]} : vector<6x27xf32> to vector<6x1xf32>
    %239 = vector.broadcast %238 : vector<6x1xf32> to vector<6x256xf32>
    %240 = arith.mulf %237, %239 : vector<6x256xf32>
    %241 = arith.addf %236, %240 : vector<6x256xf32>
    %c222_i32_50 = arith.constant 222 : i32
    %242 = tpu.dynamic_rotate %202 by %c222_i32_50 dim 1 : vector<6x256xf32>, i32 -> vector<6x256xf32>
    %243 = vector.extract_strided_slice %0 {offsets = [0, 17], sizes = [6, 1], strides = [1, 1]} : vector<6x27xf32> to vector<6x1xf32>
    %244 = vector.broadcast %243 : vector<6x1xf32> to vector<6x256xf32>
    %245 = arith.mulf %242, %244 : vector<6x256xf32>
    %246 = arith.addf %241, %245 : vector<6x256xf32>
    %c2_51 = arith.constant 2 : index
    %c1_52 = arith.constant 1 : index
    %c0_53 = arith.constant 0 : index
    %247 = vector.load %arg1[%c2_51, %c1_52, %c0_53] : memref<3x2x256xf32, #tpu.memory_space<vmem>>, vector<1x1x256xf32>
    %248 = vector.shape_cast %247 : vector<1x1x256xf32> to vector<1x256xf32>
    %249 = vector.shape_cast %248 : vector<1x256xf32> to vector<1x256xf32>
    %250 = vector.broadcast %249 : vector<1x256xf32> to vector<6x256xf32>
    %251 = vector.extract_strided_slice %0 {offsets = [0, 18], sizes = [6, 1], strides = [1, 1]} : vector<6x27xf32> to vector<6x1xf32>
    %252 = vector.broadcast %251 : vector<6x1xf32> to vector<6x256xf32>
    %253 = arith.mulf %250, %252 : vector<6x256xf32>
    %254 = arith.addf %246, %253 : vector<6x256xf32>
    %c255_i32_54 = arith.constant 255 : i32
    %255 = tpu.dynamic_rotate %250 by %c255_i32_54 dim 1 : vector<6x256xf32>, i32 -> vector<6x256xf32>
    %256 = vector.extract_strided_slice %0 {offsets = [0, 19], sizes = [6, 1], strides = [1, 1]} : vector<6x27xf32> to vector<6x1xf32>
    %257 = vector.broadcast %256 : vector<6x1xf32> to vector<6x256xf32>
    %258 = arith.mulf %255, %257 : vector<6x256xf32>
    %259 = arith.addf %254, %258 : vector<6x256xf32>
    %c254_i32_55 = arith.constant 254 : i32
    %260 = tpu.dynamic_rotate %250 by %c254_i32_55 dim 1 : vector<6x256xf32>, i32 -> vector<6x256xf32>
    %261 = vector.extract_strided_slice %0 {offsets = [0, 20], sizes = [6, 1], strides = [1, 1]} : vector<6x27xf32> to vector<6x1xf32>
    %262 = vector.broadcast %261 : vector<6x1xf32> to vector<6x256xf32>
    %263 = arith.mulf %260, %262 : vector<6x256xf32>
    %264 = arith.addf %259, %263 : vector<6x256xf32>
    %c240_i32_56 = arith.constant 240 : i32
    %265 = tpu.dynamic_rotate %250 by %c240_i32_56 dim 1 : vector<6x256xf32>, i32 -> vector<6x256xf32>
    %266 = vector.extract_strided_slice %0 {offsets = [0, 21], sizes = [6, 1], strides = [1, 1]} : vector<6x27xf32> to vector<6x1xf32>
    %267 = vector.broadcast %266 : vector<6x1xf32> to vector<6x256xf32>
    %268 = arith.mulf %265, %267 : vector<6x256xf32>
    %269 = arith.addf %264, %268 : vector<6x256xf32>
    %c239_i32_57 = arith.constant 239 : i32
    %270 = tpu.dynamic_rotate %250 by %c239_i32_57 dim 1 : vector<6x256xf32>, i32 -> vector<6x256xf32>
    %271 = vector.extract_strided_slice %0 {offsets = [0, 22], sizes = [6, 1], strides = [1, 1]} : vector<6x27xf32> to vector<6x1xf32>
    %272 = vector.broadcast %271 : vector<6x1xf32> to vector<6x256xf32>
    %273 = arith.mulf %270, %272 : vector<6x256xf32>
    %274 = arith.addf %269, %273 : vector<6x256xf32>
    %c238_i32_58 = arith.constant 238 : i32
    %275 = tpu.dynamic_rotate %250 by %c238_i32_58 dim 1 : vector<6x256xf32>, i32 -> vector<6x256xf32>
    %276 = vector.extract_strided_slice %0 {offsets = [0, 23], sizes = [6, 1], strides = [1, 1]} : vector<6x27xf32> to vector<6x1xf32>
    %277 = vector.broadcast %276 : vector<6x1xf32> to vector<6x256xf32>
    %278 = arith.mulf %275, %277 : vector<6x256xf32>
    %279 = arith.addf %274, %278 : vector<6x256xf32>
    %c224_i32_59 = arith.constant 224 : i32
    %280 = tpu.dynamic_rotate %250 by %c224_i32_59 dim 1 : vector<6x256xf32>, i32 -> vector<6x256xf32>
    %281 = vector.extract_strided_slice %0 {offsets = [0, 24], sizes = [6, 1], strides = [1, 1]} : vector<6x27xf32> to vector<6x1xf32>
    %282 = vector.broadcast %281 : vector<6x1xf32> to vector<6x256xf32>
    %283 = arith.mulf %280, %282 : vector<6x256xf32>
    %284 = arith.addf %279, %283 : vector<6x256xf32>
    %c223_i32_60 = arith.constant 223 : i32
    %285 = tpu.dynamic_rotate %250 by %c223_i32_60 dim 1 : vector<6x256xf32>, i32 -> vector<6x256xf32>
    %286 = vector.extract_strided_slice %0 {offsets = [0, 25], sizes = [6, 1], strides = [1, 1]} : vector<6x27xf32> to vector<6x1xf32>
    %287 = vector.broadcast %286 : vector<6x1xf32> to vector<6x256xf32>
    %288 = arith.mulf %285, %287 : vector<6x256xf32>
    %289 = arith.addf %284, %288 : vector<6x256xf32>
    %c222_i32_61 = arith.constant 222 : i32
    %290 = tpu.dynamic_rotate %250 by %c222_i32_61 dim 1 : vector<6x256xf32>, i32 -> vector<6x256xf32>
    %291 = vector.extract_strided_slice %0 {offsets = [0, 26], sizes = [6, 1], strides = [1, 1]} : vector<6x27xf32> to vector<6x1xf32>
    %292 = vector.broadcast %291 : vector<6x1xf32> to vector<6x256xf32>
    %293 = arith.mulf %290, %292 : vector<6x256xf32>
    %294 = arith.addf %289, %293 : vector<6x256xf32>
    %c1_62 = arith.constant 1 : index
    %c0_63 = arith.constant 0 : index
    %c0_64 = arith.constant 0 : index
    %295 = vector.load %arg4[%c1_62, %c0_63, %c0_64] : memref<2x6x256xf32, #tpu.memory_space<vmem>>, vector<1x6x256xf32>
    %296 = vector.shape_cast %295 : vector<1x6x256xf32> to vector<6x256xf32>
    %297 = vector.shape_cast %294 : vector<6x256xf32> to vector<1x6x256xf32>
    tpu.vector_store %arg4[%c1_62, %c0_63, %c0_64], %297 {strides = array<i32>} : memref<2x6x256xf32, #tpu.memory_space<vmem>>, vector<1x6x256xf32>,
    return
  }
  func.func @transform_0(%arg0: i32) -> (i32, i32, i32) {
    %c0_i32 = arith.constant 0 : i32
    %c0_i32_0 = arith.constant 0 : i32
    %c0_i32_1 = arith.constant 0 : i32
    return %c0_i32, %arg0, %c0_i32_0 : i32, i32, i32
  }
  func.func @transform_1(%arg0: i32) -> (i32, i32) {
    %c0_i32 = arith.constant 0 : i32
    %c0_i32_0 = arith.constant 0 : i32
    %c0_i32_1 = arith.constant 0 : i32
    return %c0_i32, %c0_i32_0 : i32, i32
  }
  func.func @transform_2(%arg0: i32) -> (i32, i32) {
    %c0_i32 = arith.constant 0 : i32
    %c0_i32_0 = arith.constant 0 : i32
    %c0_i32_1 = arith.constant 0 : i32
    return %c0_i32, %c0_i32_0 : i32, i32
  }
  func.func @transform_3(%arg0: i32) -> (i32, i32, i32) {
    %c0_i32 = arith.constant 0 : i32
    %c0_i32_0 = arith.constant 0 : i32
    %c0_i32_1 = arith.constant 0 : i32
    return %arg0, %c0_i32, %c0_i32_0 : i32, i32, i32
  }
}

</mosaic_0001>

<llo_original>
// kernel: tpu_custom_call.1
$region0: #{tpu_custom_call.1}
  #allocation0 [shape = 'u32[]', space=smem, size = 0x4, offset = 0x4, fixed_abs, tag = 'smem constant byte address 0x4 - core index']
  #allocation1 [shape = 'u32[72,128]{1,0:T(1,128)}', space=vmem, size = 0x9000, scoped, tag = 'internal scratch']
  %s0 = inlined_call_operand.hbm [shape: f32[3,2,256], index: 0, kind: input, shape index: {}]
  %s1 = inlined_call_operand.vmem [shape: f32[6,27], index: 1, kind: input, shape index: {}]
  %s2 = inlined_call_operand.vmem [shape: f32[6,1], index: 2, kind: input, shape index: {}]
  %s3 = inlined_call_operand.vmem [shape: f32[2,6,256], index: 3, kind: output, shape index: {}]
  %s4 = sld [smem:[#allocation0]]
  $region26: #{tpu_custom_call.1} parent=0
    _
  %s6 = ssub.s32 1, %s4
  %s7 = scalar_select 0, %s6, %s4
  $region1: #{tpu_custom_call.1} parent=0
    #allocation2 [shape = 'u8[6144]{0}', space=vmem, size = 0x1800, scoped, tag = 'input window, operand 0, single buffered']
    #allocation3 [shape = 's32[1]{0}', space=sflag, size = 0x4, scoped, tag = 'scoped memory for tpu_custom_call.1']
    %8 = vsyncpa [#allocation3], 0
    // Predicated region
    $region2: #{tpu_custom_call.1} parent=1 // pred_check
      _
    $region3: #{tpu_custom_call.1} parent=1 // pred_check_branch
      %10 = sbr.rel (0) target = $region5
    $region4: #{tpu_custom_call.1} parent=1 // pred_region
      %12 = vsyncadd [#allocation3], 0
      %s13 = sshll.u32 %s0, 4
      %s14 = int_to_ptr.hbm [resolvable:$true] %s13
      %s15 = sshll.u32 [#allocation2], 4
      %s16 = int_to_ptr.vmem [resolvable:$true] %s15
      %21 = dma.hbm_to_vmem [thread:$0]  %s14, 192, %s16, [#allocation3], 64, 64, 4
    $region5: #{tpu_custom_call.1} parent=1 // pred_fallthru
      _
    // Predicated region
    $region6: #{tpu_custom_call.1} parent=1 // pred_check
      _
    $region7: #{tpu_custom_call.1} parent=1 // pred_check_branch
      %23 = sbr.rel (0) target = $region9
    $region8: #{tpu_custom_call.1} parent=1 // pred_region
      _
    $region9: #{tpu_custom_call.1} parent=1 // pred_fallthru
      _
    // Predicated region
    $region10: #{tpu_custom_call.1} parent=1 // pred_check
      _
    $region11: #{tpu_custom_call.1} parent=1 // pred_check_branch
      %25 = sbr.rel (0) target = $region13
    $region12: #{tpu_custom_call.1} parent=1 // pred_region
      _
    $region13: #{tpu_custom_call.1} parent=1 // pred_fallthru
      _
    // Predicated region
    $region14: #{tpu_custom_call.1} parent=1 // pred_check
      _
    $region15: #{tpu_custom_call.1} parent=1 // pred_check_branch
      %27 = sbr.rel (0) target = $region17
    $region16: #{tpu_custom_call.1} parent=1 // pred_region
      %29 = dma.done [#allocation3], 192
    $region17: #{tpu_custom_call.1} parent=1 // pred_fallthru
      _
    %v30 = vld [vmem:[%s1] sm:$0x3f]
    %v31 = vld [vmem:[%s2] sm:$0x3f]
    %33 = vset.pattern.permute.xlu0 0
    %34 = vperm.xlu0 %33, %v31
    %v35 = vpop.permute.xlu0 %34
    %v37 = vld [vmem:[#allocation2] ss:$2 sm:$0x3]
    %v39 = vperm.slane %v37, 0
    %v40 = vperm.slane %v37, 1
    %44 = vset.pattern.permute.xlu0 0
    %45 = vperm.xlu0 %44, %v30
    %v46 = vpop.permute.xlu0 %45
    %v48 = vmul.f32 %v39, %v46
    %v49 = vmul.f32 %v40, %v46
    %v50 = vadd.f32 %v35, %v48
    %v51 = vadd.f32 %v35, %v49
    %52 = vrot.lane.b32.xlu0 %v39, 127
    %v53 = vpop.permute.xlu0 %52
    %54 = vrot.lane.b32.xlu0 %v40, 127
    %v55 = vpop.permute.xlu0 %54
    %v56 = vlaneseq
    %v57 = vand.u32 %v56, 127
    %vm58 = vcmp.lt.s32.totalorder %v57, 127
    %v59 = vsel %vm58, %v53, %v55
    %v60 = vsel %vm58, %v55, %v53
    %61 = vset.pattern.permute.xlu0 1
    %62 = vperm.xlu0 %61, %v30
    %v63 = vpop.permute.xlu0 %62
    %v65 = vmul.f32 %v59, %v63
    %v66 = vmul.f32 %v60, %v63
    %v67 = vadd.f32 %v50, %v65
    %v68 = vadd.f32 %v51, %v66
    %69 = vrot.lane.b32.xlu0 %v39, 126
    %v70 = vpop.permute.xlu0 %69
    %71 = vrot.lane.b32.xlu0 %v40, 126
    %v72 = vpop.permute.xlu0 %71
    %vm73 = vcmp.lt.s32.totalorder %v57, 126
    %v74 = vsel %vm73, %v70, %v72
    %v75 = vsel %vm73, %v72, %v70
    %76 = vset.pattern.permute.xlu0 2
    %77 = vperm.xlu0 %76, %v30
    %v78 = vpop.permute.xlu0 %77
    %v80 = vmul.f32 %v74, %v78
    %v81 = vmul.f32 %v75, %v78
    %v82 = vadd.f32 %v67, %v80
    %v83 = vadd.f32 %v68, %v81
    %84 = vrot.lane.b32.xlu0 %v39, 112
    %v85 = vpop.permute.xlu0 %84
    %86 = vrot.lane.b32.xlu0 %v40, 112
    %v87 = vpop.permute.xlu0 %86
    %vm88 = vcmp.lt.s32.totalorder %v57, 112
    %v89 = vsel %vm88, %v85, %v87
    %v90 = vsel %vm88, %v87, %v85
    %91 = vset.pattern.permute.xlu0 3
    %92 = vperm.xlu0 %91, %v30
    %v93 = vpop.permute.xlu0 %92
    %v95 = vmul.f32 %v89, %v93
    %v96 = vmul.f32 %v90, %v93
    %v97 = vadd.f32 %v82, %v95
    %v98 = vadd.f32 %v83, %v96
    %99 = vrot.lane.b32.xlu0 %v39, 111
    %v100 = vpop.permute.xlu0 %99
    %101 = vrot.lane.b32.xlu0 %v40, 111
    %v102 = vpop.permute.xlu0 %101
    %vm103 = vcmp.lt.s32.totalorder %v57, 111
    %v104 = vsel %vm103, %v100, %v102
    %v105 = vsel %vm103, %v102, %v100
    %106 = vset.pattern.permute.xlu0 4
    %107 = vperm.xlu0 %106, %v30
    %v108 = vpop.permute.xlu0 %107
    %v110 = vmul.f32 %v104, %v108
    %v111 = vmul.f32 %v105, %v108
    %v112 = vadd.f32 %v97, %v110
    %v113 = vadd.f32 %v98, %v111
    %114 = vrot.lane.b32.xlu0 %v39, 110
    %v115 = vpop.permute.xlu0 %114
    %116 = vrot.lane.b32.xlu0 %v40, 110
    %v117 = vpop.permute.xlu0 %116
    %vm118 = vcmp.lt.s32.totalorder %v57, 110
    %v119 = vsel %vm118, %v115, %v117
    %v120 = vsel %vm118, %v117, %v115
    %121 = vset.pattern.permute.xlu0 5
    %122 = vperm.xlu0 %121, %v30
    %v123 = vpop.permute.xlu0 %122
    %v125 = vmul.f32 %v119, %v123
    %v126 = vmul.f32 %v120, %v123
    %v127 = vadd.f32 %v112, %v125
    %v128 = vadd.f32 %v113, %v126
    %129 = vrot.lane.b32.xlu0 %v39, 96
    %v130 = vpop.permute.xlu0 %129
    %131 = vrot.lane.b32.xlu0 %v40, 96
    %v132 = vpop.permute.xlu0 %131
    %vm133 = vcmp.lt.s32.totalorder %v57, 96
    %v134 = vsel %vm133, %v130, %v132
    %v135 = vsel %vm133, %v132, %v130
    %136 = vset.pattern.permute.xlu0 6
    %137 = vperm.xlu0 %136, %v30
    %v138 = vpop.permute.xlu0 %137
    %v140 = vmul.f32 %v134, %v138
    %v141 = vmul.f32 %v135, %v138
    %v142 = vadd.f32 %v127, %v140
    %v143 = vadd.f32 %v128, %v141
    %144 = vrot.lane.b32.xlu0 %v39, 95
    %v145 = vpop.permute.xlu0 %144
    %146 = vrot.lane.b32.xlu0 %v40, 95
    %v147 = vpop.permute.xlu0 %146
    %vm148 = vcmp.lt.s32.totalorder %v57, 95
    %v149 = vsel %vm148, %v145, %v147
    %v150 = vsel %vm148, %v147, %v145
    %151 = vset.pattern.permute.xlu0 7
    %152 = vperm.xlu0 %151, %v30
    %v153 = vpop.permute.xlu0 %152
    %v155 = vmul.f32 %v149, %v153
    %v156 = vmul.f32 %v150, %v153
    %v157 = vadd.f32 %v142, %v155
    %v158 = vadd.f32 %v143, %v156
    %159 = vrot.lane.b32.xlu0 %v39, 94
    %v160 = vpop.permute.xlu0 %159
    %161 = vrot.lane.b32.xlu0 %v40, 94
    %v162 = vpop.permute.xlu0 %161
    %vm163 = vcmp.lt.s32.totalorder %v57, 94
    %v164 = vsel %vm163, %v160, %v162
    %v165 = vsel %vm163, %v162, %v160
    %166 = vset.pattern.permute.xlu0 8
    %167 = vperm.xlu0 %166, %v30
    %v168 = vpop.permute.xlu0 %167
    %v170 = vmul.f32 %v164, %v168
    %v171 = vmul.f32 %v165, %v168
    %v172 = vadd.f32 %v157, %v170
    %v173 = vadd.f32 %v158, %v171
    %s174 = scalar_lea.vmem [#allocation2], 4
    %v175 = vld [vmem:[%s174] ss:$2 sm:$0x3]
    %v177 = vperm.slane %v175, 0
    %v178 = vperm.slane %v175, 1
    %181 = vset.pattern.permute.xlu0 9
    %182 = vperm.xlu0 %181, %v30
    %v183 = vpop.permute.xlu0 %182
    %v185 = vmul.f32 %v177, %v183
    %v186 = vmul.f32 %v178, %v183
    %v187 = vadd.f32 %v172, %v185
    %v188 = vadd.f32 %v173, %v186
    %189 = vrot.lane.b32.xlu0 %v177, 127
    %v190 = vpop.permute.xlu0 %189
    %191 = vrot.lane.b32.xlu0 %v178, 127
    %v192 = vpop.permute.xlu0 %191
    %v193 = vsel %vm58, %v190, %v192
    %v194 = vsel %vm58, %v192, %v190
    %195 = vset.pattern.permute.xlu0 10
    %196 = vperm.xlu0 %195, %v30
    %v197 = vpop.permute.xlu0 %196
    %v199 = vmul.f32 %v193, %v197
    %v200 = vmul.f32 %v194, %v197
    %v201 = vadd.f32 %v187, %v199
    %v202 = vadd.f32 %v188, %v200
    %203 = vrot.lane.b32.xlu0 %v177, 126
    %v204 = vpop.permute.xlu0 %203
    %205 = vrot.lane.b32.xlu0 %v178, 126
    %v206 = vpop.permute.xlu0 %205
    %v207 = vsel %vm73, %v204, %v206
    %v208 = vsel %vm73, %v206, %v204
    %209 = vset.pattern.permute.xlu0 11
    %210 = vperm.xlu0 %209, %v30
    %v211 = vpop.permute.xlu0 %210
    %v213 = vmul.f32 %v207, %v211
    %v214 = vmul.f32 %v208, %v211
    %v215 = vadd.f32 %v201, %v213
    %v216 = vadd.f32 %v202, %v214
    %217 = vrot.lane.b32.xlu0 %v177, 112
    %v218 = vpop.permute.xlu0 %217
    %219 = vrot.lane.b32.xlu0 %v178, 112
    %v220 = vpop.permute.xlu0 %219
    %v221 = vsel %vm88, %v218, %v220
    %v222 = vsel %vm88, %v220, %v218
    %223 = vset.pattern.permute.xlu0 12
    %224 = vperm.xlu0 %223, %v30
    %v225 = vpop.permute.xlu0 %224
    %v227 = vmul.f32 %v221, %v225
    %v228 = vmul.f32 %v222, %v225
    %v229 = vadd.f32 %v215, %v227
    %v230 = vadd.f32 %v216, %v228
    %231 = vrot.lane.b32.xlu0 %v177, 111
    %v232 = vpop.permute.xlu0 %231
    %233 = vrot.lane.b32.xlu0 %v178, 111
    %v234 = vpop.permute.xlu0 %233
    %v235 = vsel %vm103, %v232, %v234
    %v236 = vsel %vm103, %v234, %v232
    %237 = vset.pattern.permute.xlu0 13
    %238 = vperm.xlu0 %237, %v30
    %v239 = vpop.permute.xlu0 %238
    %v241 = vmul.f32 %v235, %v239
    %v242 = vmul.f32 %v236, %v239
    %v243 = vadd.f32 %v229, %v241
    %v244 = vadd.f32 %v230, %v242
    %245 = vrot.lane.b32.xlu0 %v177, 110
    %v246 = vpop.permute.xlu0 %245
    %247 = vrot.lane.b32.xlu0 %v178, 110
    %v248 = vpop.permute.xlu0 %247
    %v249 = vsel %vm118, %v246, %v248
    %v250 = vsel %vm118, %v248, %v246
    %251 = vset.pattern.permute.xlu0 14
    %252 = vperm.xlu0 %251, %v30
    %v253 = vpop.permute.xlu0 %252
    %v255 = vmul.f32 %v249, %v253
    %v256 = vmul.f32 %v250, %v253
    %v257 = vadd.f32 %v243, %v255
    %v258 = vadd.f32 %v244, %v256
    %259 = vrot.lane.b32.xlu0 %v177, 96
    %v260 = vpop.permute.xlu0 %259
    %261 = vrot.lane.b32.xlu0 %v178, 96
    %v262 = vpop.permute.xlu0 %261
    %v263 = vsel %vm133, %v260, %v262
    %v264 = vsel %vm133, %v262, %v260
    %265 = vset.pattern.permute.xlu0 15
    %266 = vperm.xlu0 %265, %v30
    %v267 = vpop.permute.xlu0 %266
    %v269 = vmul.f32 %v263, %v267
    %v270 = vmul.f32 %v264, %v267
    %v271 = vadd.f32 %v257, %v269
    %v272 = vadd.f32 %v258, %v270
    %273 = vrot.lane.b32.xlu0 %v177, 95
    %v274 = vpop.permute.xlu0 %273
    %275 = vrot.lane.b32.xlu0 %v178, 95
    %v276 = vpop.permute.xlu0 %275
    %v277 = vsel %vm148, %v274, %v276
    %v278 = vsel %vm148, %v276, %v274
    %279 = vset.pattern.permute.xlu0 16
    %280 = vperm.xlu0 %279, %v30
    %v281 = vpop.permute.xlu0 %280
    %v283 = vmul.f32 %v277, %v281
    %v284 = vmul.f32 %v278, %v281
    %v285 = vadd.f32 %v271, %v283
    %v286 = vadd.f32 %v272, %v284
    %287 = vrot.lane.b32.xlu0 %v177, 94
    %v288 = vpop.permute.xlu0 %287
    %289 = vrot.lane.b32.xlu0 %v178, 94
    %v290 = vpop.permute.xlu0 %289
    %v291 = vsel %vm163, %v288, %v290
    %v292 = vsel %vm163, %v290, %v288
    %293 = vset.pattern.permute.xlu0 17
    %294 = vperm.xlu0 %293, %v30
    %v295 = vpop.permute.xlu0 %294
    %v297 = vmul.f32 %v291, %v295
    %v298 = vmul.f32 %v292, %v295
    %v299 = vadd.f32 %v285, %v297
    %v300 = vadd.f32 %v286, %v298
    %s301 = scalar_lea.vmem [#allocation2], 8
    %v302 = vld [vmem:[%s301] ss:$2 sm:$0x3]
    %v304 = vperm.slane %v302, 0
    %v305 = vperm.slane %v302, 1
    %308 = vset.pattern.permute.xlu0 18
    %309 = vperm.xlu0 %308, %v30
    %v310 = vpop.permute.xlu0 %309
    %v312 = vmul.f32 %v304, %v310
    %v313 = vmul.f32 %v305, %v310
    %v314 = vadd.f32 %v299, %v312
    %v315 = vadd.f32 %v300, %v313
    %316 = vrot.lane.b32.xlu0 %v304, 127
    %v317 = vpop.permute.xlu0 %316
    %318 = vrot.lane.b32.xlu0 %v305, 127
    %v319 = vpop.permute.xlu0 %318
    %v320 = vsel %vm58, %v317, %v319
    %v321 = vsel %vm58, %v319, %v317
    %322 = vset.pattern.permute.xlu0 19
    %323 = vperm.xlu0 %322, %v30
    %v324 = vpop.permute.xlu0 %323
    %v326 = vmul.f32 %v320, %v324
    %v327 = vmul.f32 %v321, %v324
    %v328 = vadd.f32 %v314, %v326
    %v329 = vadd.f32 %v315, %v327
    %330 = vrot.lane.b32.xlu0 %v304, 126
    %v331 = vpop.permute.xlu0 %330
    %332 = vrot.lane.b32.xlu0 %v305, 126
    %v333 = vpop.permute.xlu0 %332
    %v334 = vsel %vm73, %v331, %v333
    %v335 = vsel %vm73, %v333, %v331
    %336 = vset.pattern.permute.xlu0 20
    %337 = vperm.xlu0 %336, %v30
    %v338 = vpop.permute.xlu0 %337
    %v340 = vmul.f32 %v334, %v338
    %v341 = vmul.f32 %v335, %v338
    %v342 = vadd.f32 %v328, %v340
    %v343 = vadd.f32 %v329, %v341
    %344 = vrot.lane.b32.xlu0 %v304, 112
    %v345 = vpop.permute.xlu0 %344
    %346 = vrot.lane.b32.xlu0 %v305, 112
    %v347 = vpop.permute.xlu0 %346
    %v348 = vsel %vm88, %v345, %v347
    %v349 = vsel %vm88, %v347, %v345
    %350 = vset.pattern.permute.xlu0 21
    %351 = vperm.xlu0 %350, %v30
    %v352 = vpop.permute.xlu0 %351
    %v354 = vmul.f32 %v348, %v352
    %v355 = vmul.f32 %v349, %v352
    %v356 = vadd.f32 %v342, %v354
    %v357 = vadd.f32 %v343, %v355
    %358 = vrot.lane.b32.xlu0 %v304, 111
    %v359 = vpop.permute.xlu0 %358
    %360 = vrot.lane.b32.xlu0 %v305, 111
    %v361 = vpop.permute.xlu0 %360
    %v362 = vsel %vm103, %v359, %v361
    %v363 = vsel %vm103, %v361, %v359
    %364 = vset.pattern.permute.xlu0 22
    %365 = vperm.xlu0 %364, %v30
    %v366 = vpop.permute.xlu0 %365
    %v368 = vmul.f32 %v362, %v366
    %v369 = vmul.f32 %v363, %v366
    %v370 = vadd.f32 %v356, %v368
    %v371 = vadd.f32 %v357, %v369
    %372 = vrot.lane.b32.xlu0 %v304, 110
    %v373 = vpop.permute.xlu0 %372
    %374 = vrot.lane.b32.xlu0 %v305, 110
    %v375 = vpop.permute.xlu0 %374
    %v376 = vsel %vm118, %v373, %v375
    %v377 = vsel %vm118, %v375, %v373
    %378 = vset.pattern.permute.xlu0 23
    %379 = vperm.xlu0 %378, %v30
    %v380 = vpop.permute.xlu0 %379
    %v382 = vmul.f32 %v376, %v380
    %v383 = vmul.f32 %v377, %v380
    %v384 = vadd.f32 %v370, %v382
    %v385 = vadd.f32 %v371, %v383
    %386 = vrot.lane.b32.xlu0 %v304, 96
    %v387 = vpop.permute.xlu0 %386
    %388 = vrot.lane.b32.xlu0 %v305, 96
    %v389 = vpop.permute.xlu0 %388
    %v390 = vsel %vm133, %v387, %v389
    %v391 = vsel %vm133, %v389, %v387
    %392 = vset.pattern.permute.xlu0 24
    %393 = vperm.xlu0 %392, %v30
    %v394 = vpop.permute.xlu0 %393
    %v396 = vmul.f32 %v390, %v394
    %v397 = vmul.f32 %v391, %v394
    %v398 = vadd.f32 %v384, %v396
    %v399 = vadd.f32 %v385, %v397
    %400 = vrot.lane.b32.xlu0 %v304, 95
    %v401 = vpop.permute.xlu0 %400
    %402 = vrot.lane.b32.xlu0 %v305, 95
    %v403 = vpop.permute.xlu0 %402
    %v404 = vsel %vm148, %v401, %v403
    %v405 = vsel %vm148, %v403, %v401
    %406 = vset.pattern.permute.xlu0 25
    %407 = vperm.xlu0 %406, %v30
    %v408 = vpop.permute.xlu0 %407
    %v410 = vmul.f32 %v404, %v408
    %v411 = vmul.f32 %v405, %v408
    %v412 = vadd.f32 %v398, %v410
    %v413 = vadd.f32 %v399, %v411
    %414 = vrot.lane.b32.xlu0 %v304, 94
    %v415 = vpop.permute.xlu0 %414
    %416 = vrot.lane.b32.xlu0 %v305, 94
    %v417 = vpop.permute.xlu0 %416
    %v418 = vsel %vm163, %v415, %v417
    %v419 = vsel %vm163, %v417, %v415
    %420 = vset.pattern.permute.xlu0 26
    %421 = vperm.xlu0 %420, %v30
    %v422 = vpop.permute.xlu0 %421
    %v424 = vmul.f32 %v418, %v422
    %v425 = vmul.f32 %v419, %v422
    %v426 = vadd.f32 %v412, %v424
    %v427 = vadd.f32 %v413, %v425
    %428 = vst [vmem:[%s3] sm:$0x3f] %v426
    %429 = vst [vmem:[%s3 + $0x8] sm:$0x3f] %v427
    %s430 = scalar_lea.vmem [#allocation2], 1
    %v431 = vld [vmem:[%s430] ss:$2 sm:$0x3]
    %v433 = vperm.slane %v431, 0
    %v434 = vperm.slane %v431, 1
    %v437 = vmul.f32 %v433, %v46
    %v438 = vmul.f32 %v434, %v46
    %v439 = vadd.f32 %v35, %v437
    %v440 = vadd.f32 %v35, %v438
    %441 = vrot.lane.b32.xlu0 %v433, 127
    %v442 = vpop.permute.xlu0 %441
    %443 = vrot.lane.b32.xlu0 %v434, 127
    %v444 = vpop.permute.xlu0 %443
    %v445 = vsel %vm58, %v442, %v444
    %v446 = vsel %vm58, %v444, %v442
    %v447 = vmul.f32 %v445, %v63
    %v448 = vmul.f32 %v446, %v63
    %v449 = vadd.f32 %v439, %v447
    %v450 = vadd.f32 %v440, %v448
    %451 = vrot.lane.b32.xlu0 %v433, 126
    %v452 = vpop.permute.xlu0 %451
    %453 = vrot.lane.b32.xlu0 %v434, 126
    %v454 = vpop.permute.xlu0 %453
    %v455 = vsel %vm73, %v452, %v454
    %v456 = vsel %vm73, %v454, %v452
    %v457 = vmul.f32 %v455, %v78
    %v458 = vmul.f32 %v456, %v78
    %v459 = vadd.f32 %v449, %v457
    %v460 = vadd.f32 %v450, %v458
    %461 = vrot.lane.b32.xlu0 %v433, 112
    %v462 = vpop.permute.xlu0 %461
    %463 = vrot.lane.b32.xlu0 %v434, 112
    %v464 = vpop.permute.xlu0 %463
    %v465 = vsel %vm88, %v462, %v464
    %v466 = vsel %vm88, %v464, %v462
    %v467 = vmul.f32 %v465, %v93
    %v468 = vmul.f32 %v466, %v93
    %v469 = vadd.f32 %v459, %v467
    %v470 = vadd.f32 %v460, %v468
    %471 = vrot.lane.b32.xlu0 %v433, 111
    %v472 = vpop.permute.xlu0 %471
    %473 = vrot.lane.b32.xlu0 %v434, 111
    %v474 = vpop.permute.xlu0 %473
    %v475 = vsel %vm103, %v472, %v474
    %v476 = vsel %vm103, %v474, %v472
    %v477 = vmul.f32 %v475, %v108
    %v478 = vmul.f32 %v476, %v108
    %v479 = vadd.f32 %v469, %v477
    %v480 = vadd.f32 %v470, %v478
    %481 = vrot.lane.b32.xlu0 %v433, 110
    %v482 = vpop.permute.xlu0 %481
    %483 = vrot.lane.b32.xlu0 %v434, 110
    %v484 = vpop.permute.xlu0 %483
    %v485 = vsel %vm118, %v482, %v484
    %v486 = vsel %vm118, %v484, %v482
    %v487 = vmul.f32 %v485, %v123
    %v488 = vmul.f32 %v486, %v123
    %v489 = vadd.f32 %v479, %v487
    %v490 = vadd.f32 %v480, %v488
    %491 = vrot.lane.b32.xlu0 %v433, 96
    %v492 = vpop.permute.xlu0 %491
    %493 = vrot.lane.b32.xlu0 %v434, 96
    %v494 = vpop.permute.xlu0 %493
    %v495 = vsel %vm133, %v492, %v494
    %v496 = vsel %vm133, %v494, %v492
    %v497 = vmul.f32 %v495, %v138
    %v498 = vmul.f32 %v496, %v138
    %v499 = vadd.f32 %v489, %v497
    %v500 = vadd.f32 %v490, %v498
    %501 = vrot.lane.b32.xlu0 %v433, 95
    %v502 = vpop.permute.xlu0 %501
    %503 = vrot.lane.b32.xlu0 %v434, 95
    %v504 = vpop.permute.xlu0 %503
    %v505 = vsel %vm148, %v502, %v504
    %v506 = vsel %vm148, %v504, %v502
    %v507 = vmul.f32 %v505, %v153
    %v508 = vmul.f32 %v506, %v153
    %v509 = vadd.f32 %v499, %v507
    %v510 = vadd.f32 %v500, %v508
    %511 = vrot.lane.b32.xlu0 %v433, 94
    %v512 = vpop.permute.xlu0 %511
    %513 = vrot.lane.b32.xlu0 %v434, 94
    %v514 = vpop.permute.xlu0 %513
    %v515 = vsel %vm163, %v512, %v514
    %v516 = vsel %vm163, %v514, %v512
    %v517 = vmul.f32 %v515, %v168
    %v518 = vmul.f32 %v516, %v168
    %v519 = vadd.f32 %v509, %v517
    %v520 = vadd.f32 %v510, %v518
    %s521 = scalar_lea.vmem %s174, 1 [#allocation2]
    %v522 = vld [vmem:[%s521] ss:$2 sm:$0x3]
    %v524 = vperm.slane %v522, 0
    %v525 = vperm.slane %v522, 1
    %v528 = vmul.f32 %v524, %v183
    %v529 = vmul.f32 %v525, %v183
    %v530 = vadd.f32 %v519, %v528
    %v531 = vadd.f32 %v520, %v529
    %532 = vrot.lane.b32.xlu0 %v524, 127
    %v533 = vpop.permute.xlu0 %532
    %534 = vrot.lane.b32.xlu0 %v525, 127
    %v535 = vpop.permute.xlu0 %534
    %v536 = vsel %vm58, %v533, %v535
    %v537 = vsel %vm58, %v535, %v533
    %v538 = vmul.f32 %v536, %v197
    %v539 = vmul.f32 %v537, %v197
    %v540 = vadd.f32 %v530, %v538
    %v541 = vadd.f32 %v531, %v539
    %542 = vrot.lane.b32.xlu0 %v524, 126
    %v543 = vpop.permute.xlu0 %542
    %544 = vrot.lane.b32.xlu0 %v525, 126
    %v545 = vpop.permute.xlu0 %544
    %v546 = vsel %vm73, %v543, %v545
    %v547 = vsel %vm73, %v545, %v543
    %v548 = vmul.f32 %v546, %v211
    %v549 = vmul.f32 %v547, %v211
    %v550 = vadd.f32 %v540, %v548
    %v551 = vadd.f32 %v541, %v549
    %552 = vrot.lane.b32.xlu0 %v524, 112
    %v553 = vpop.permute.xlu0 %552
    %554 = vrot.lane.b32.xlu0 %v525, 112
    %v555 = vpop.permute.xlu0 %554
    %v556 = vsel %vm88, %v553, %v555
    %v557 = vsel %vm88, %v555, %v553
    %v558 = vmul.f32 %v556, %v225
    %v559 = vmul.f32 %v557, %v225
    %v560 = vadd.f32 %v550, %v558
    %v561 = vadd.f32 %v551, %v559
    %562 = vrot.lane.b32.xlu0 %v524, 111
    %v563 = vpop.permute.xlu0 %562
    %564 = vrot.lane.b32.xlu0 %v525, 111
    %v565 = vpop.permute.xlu0 %564
    %v566 = vsel %vm103, %v563, %v565
    %v567 = vsel %vm103, %v565, %v563
    %v568 = vmul.f32 %v566, %v239
    %v569 = vmul.f32 %v567, %v239
    %v570 = vadd.f32 %v560, %v568
    %v571 = vadd.f32 %v561, %v569
    %572 = vrot.lane.b32.xlu0 %v524, 110
    %v573 = vpop.permute.xlu0 %572
    %574 = vrot.lane.b32.xlu0 %v525, 110
    %v575 = vpop.permute.xlu0 %574
    %v576 = vsel %vm118, %v573, %v575
    %v577 = vsel %vm118, %v575, %v573
    %v578 = vmul.f32 %v576, %v253
    %v579 = vmul.f32 %v577, %v253
    %v580 = vadd.f32 %v570, %v578
    %v581 = vadd.f32 %v571, %v579
    %582 = vrot.lane.b32.xlu0 %v524, 96
    %v583 = vpop.permute.xlu0 %582
    %584 = vrot.lane.b32.xlu0 %v525, 96
    %v585 = vpop.permute.xlu0 %584
    %v586 = vsel %vm133, %v583, %v585
    %v587 = vsel %vm133, %v585, %v583
    %v588 = vmul.f32 %v586, %v267
    %v589 = vmul.f32 %v587, %v267
    %v590 = vadd.f32 %v580, %v588
    %v591 = vadd.f32 %v581, %v589
    %592 = vrot.lane.b32.xlu0 %v524, 95
    %v593 = vpop.permute.xlu0 %592
    %594 = vrot.lane.b32.xlu0 %v525, 95
    %v595 = vpop.permute.xlu0 %594
    %v596 = vsel %vm148, %v593, %v595
    %v597 = vsel %vm148, %v595, %v593
    %v598 = vmul.f32 %v596, %v281
    %v599 = vmul.f32 %v597, %v281
    %v600 = vadd.f32 %v590, %v598
    %v601 = vadd.f32 %v591, %v599
    %602 = vrot.lane.b32.xlu0 %v524, 94
    %v603 = vpop.permute.xlu0 %602
    %604 = vrot.lane.b32.xlu0 %v525, 94
    %v605 = vpop.permute.xlu0 %604
    %v606 = vsel %vm163, %v603, %v605
    %v607 = vsel %vm163, %v605, %v603
    %v608 = vmul.f32 %v606, %v295
    %v609 = vmul.f32 %v607, %v295
    %v610 = vadd.f32 %v600, %v608
    %v611 = vadd.f32 %v601, %v609
    %s612 = scalar_lea.vmem %s301, 1 [#allocation2]
    %v613 = vld [vmem:[%s612] ss:$2 sm:$0x3]
    %v615 = vperm.slane %v613, 0
    %v616 = vperm.slane %v613, 1
    %v619 = vmul.f32 %v615, %v310
    %v620 = vmul.f32 %v616, %v310
    %v621 = vadd.f32 %v610, %v619
    %v622 = vadd.f32 %v611, %v620
    %623 = vrot.lane.b32.xlu0 %v615, 127
    %v624 = vpop.permute.xlu0 %623
    %625 = vrot.lane.b32.xlu0 %v616, 127
    %v626 = vpop.permute.xlu0 %625
    %v627 = vsel %vm58, %v624, %v626
    %v628 = vsel %vm58, %v626, %v624
    %v629 = vmul.f32 %v627, %v324
    %v630 = vmul.f32 %v628, %v324
    %v631 = vadd.f32 %v621, %v629
    %v632 = vadd.f32 %v622, %v630
    %633 = vrot.lane.b32.xlu0 %v615, 126
    %v634 = vpop.permute.xlu0 %633
    %635 = vrot.lane.b32.xlu0 %v616, 126
    %v636 = vpop.permute.xlu0 %635
    %v637 = vsel %vm73, %v634, %v636
    %v638 = vsel %vm73, %v636, %v634
    %v639 = vmul.f32 %v637, %v338
    %v640 = vmul.f32 %v638, %v338
    %v641 = vadd.f32 %v631, %v639
    %v642 = vadd.f32 %v632, %v640
    %643 = vrot.lane.b32.xlu0 %v615, 112
    %v644 = vpop.permute.xlu0 %643
    %645 = vrot.lane.b32.xlu0 %v616, 112
    %v646 = vpop.permute.xlu0 %645
    %v647 = vsel %vm88, %v644, %v646
    %v648 = vsel %vm88, %v646, %v644
    %v649 = vmul.f32 %v647, %v352
    %v650 = vmul.f32 %v648, %v352
    %v651 = vadd.f32 %v641, %v649
    %v652 = vadd.f32 %v642, %v650
    %653 = vrot.lane.b32.xlu0 %v615, 111
    %v654 = vpop.permute.xlu0 %653
    %655 = vrot.lane.b32.xlu0 %v616, 111
    %v656 = vpop.permute.xlu0 %655
    %v657 = vsel %vm103, %v654, %v656
    %v658 = vsel %vm103, %v656, %v654
    %v659 = vmul.f32 %v657, %v366
    %v660 = vmul.f32 %v658, %v366
    %v661 = vadd.f32 %v651, %v659
    %v662 = vadd.f32 %v652, %v660
    %663 = vrot.lane.b32.xlu0 %v615, 110
    %v664 = vpop.permute.xlu0 %663
    %665 = vrot.lane.b32.xlu0 %v616, 110
    %v666 = vpop.permute.xlu0 %665
    %v667 = vsel %vm118, %v664, %v666
    %v668 = vsel %vm118, %v666, %v664
    %v669 = vmul.f32 %v667, %v380
    %v670 = vmul.f32 %v668, %v380
    %v671 = vadd.f32 %v661, %v669
    %v672 = vadd.f32 %v662, %v670
    %673 = vrot.lane.b32.xlu0 %v615, 96
    %v674 = vpop.permute.xlu0 %673
    %675 = vrot.lane.b32.xlu0 %v616, 96
    %v676 = vpop.permute.xlu0 %675
    %v677 = vsel %vm133, %v674, %v676
    %v678 = vsel %vm133, %v676, %v674
    %v679 = vmul.f32 %v677, %v394
    %v680 = vmul.f32 %v678, %v394
    %v681 = vadd.f32 %v671, %v679
    %v682 = vadd.f32 %v672, %v680
    %683 = vrot.lane.b32.xlu0 %v615, 95
    %v684 = vpop.permute.xlu0 %683
    %685 = vrot.lane.b32.xlu0 %v616, 95
    %v686 = vpop.permute.xlu0 %685
    %v687 = vsel %vm148, %v684, %v686
    %v688 = vsel %vm148, %v686, %v684
    %v689 = vmul.f32 %v687, %v408
    %v690 = vmul.f32 %v688, %v408
    %v691 = vadd.f32 %v681, %v689
    %v692 = vadd.f32 %v682, %v690
    %693 = vrot.lane.b32.xlu0 %v615, 94
    %v694 = vpop.permute.xlu0 %693
    %695 = vrot.lane.b32.xlu0 %v616, 94
    %v696 = vpop.permute.xlu0 %695
    %v697 = vsel %vm163, %v694, %v696
    %v698 = vsel %vm163, %v696, %v694
    %v699 = vmul.f32 %v697, %v422
    %v700 = vmul.f32 %v698, %v422
    %v701 = vadd.f32 %v691, %v699
    %v702 = vadd.f32 %v692, %v700
    %s703 = scalar_lea.vmem %s3, 16
    %704 = vst [vmem:[%s703] sm:$0x3f] %v701
    %705 = vst [vmem:[%s703 + $0x8] sm:$0x3f] %v702
    // Predicated region
    $region18: #{tpu_custom_call.1} parent=1 // pred_check
      _
    $region19: #{tpu_custom_call.1} parent=1 // pred_check_branch
      %707 = sbr.rel (0) target = $region21
    $region20: #{tpu_custom_call.1} parent=1 // pred_region
      _
    $region21: #{tpu_custom_call.1} parent=1 // pred_fallthru
      _
    // Predicated region
    $region22: #{tpu_custom_call.1} parent=1 // pred_check
      _
    $region23: #{tpu_custom_call.1} parent=1 // pred_check_branch
      %709 = sbr.rel (0) target = $region25
    $region24: #{tpu_custom_call.1} parent=1 // pred_region
      _
    $region25: #{tpu_custom_call.1} parent=1 // pred_fallthru
      _
    %710 = vsyncpa [#allocation3], 1

</llo_original>
